<compile_context>
chip_gen: v5e
topology: v5e:2x2
jax: 0.10.0
libtpu: 0.0.40
codegen_flags: <defaults>
</compile_context>

<pallas_src>
import numpy as np
import jax
import jax.numpy as jnp
from jax.experimental import pallas as pl
from jax.experimental.pallas import tpu as pltpu


# ----------------------------------------------------------------------------
# Helpers
# ----------------------------------------------------------------------------
def _sublane_multiple(dtype) -> int:
    """Dtype-aware sublane packing multiple (f32: 8, bf16: 16, int8/fp8: 32)."""
    itemsize = np.dtype(dtype).itemsize
    if itemsize >= 4:
        return 8
    if itemsize == 2:
        return 16
    return 32


def _scoped_vmem_limit_bytes() -> int:
    """Generation-aware scoped-VMEM limit with headroom for internal scratch."""
    cap = None
    try:
        info = pltpu.get_tpu_info()
        cap = int(getattr(info, "vmem_capacity_bytes", 0)) or None
    except Exception:
        cap = None
    if cap is None:
        cap = 64 * 1024 * 1024          # conservative: v7x per-TC physical VMEM
    # ~25% headroom; never request more than 100 MiB even on 128 MiB parts.
    return int(min(cap - cap // 4, 100 * 1024 * 1024))


# ----------------------------------------------------------------------------
# Kernel
# ----------------------------------------------------------------------------
def _make_concat_kernel(col_sizes):
    """Copy each flattened input block into its static column slice of out."""
    offsets = []
    off = 0
    for k in col_sizes:
        offsets.append(off)
        off += k

    def kernel(*refs):
        in_refs = refs[:-1]
        out_ref = refs[-1]
        # Static column offsets -> plain wide vector stores whenever the
        # per-input column width / offset is lane-aligned (multiple of 128),
        # which holds whenever the trailing spatial size is (e.g. H*W = 256).
        # Non-aligned offsets are still correct (masked stores), just slower.
        for r, o, k in zip(in_refs, offsets, col_sizes):
            out_ref[:, o:o + k] = r[...]

    return kernel


# ----------------------------------------------------------------------------
# Wrapper
# ----------------------------------------------------------------------------
def concat(xs, dimension=1, *, min_pallas_bytes=2 * 1024 * 1024):
    """torch.cat(xs, dim=dimension) for same-dtype, shape-compatible arrays."""
    assert len(xs) >= 1
    nd = xs[0].ndim
    d = dimension if dimension >= 0 else dimension + nd
    base = xs[0].shape
    dtype = xs[0].dtype
    for x in xs:
        assert x.dtype == dtype, "all inputs must share a dtype"
        assert x.ndim == nd, "all inputs must share rank"
        for ax in range(nd):
            if ax != d:
                assert x.shape[ax] == base[ax], "non-concat dims must match"

    lead = base[:d]
    trail = base[d + 1:]
    M = int(np.prod(lead)) if lead else 1
    trail_sz = int(np.prod(trail)) if trail else 1
    col_sizes = [int(x.shape[d]) * trail_sz for x in xs]
    Ktot = int(sum(col_sizes))
    out_full_shape = lead + (sum(int(x.shape[d]) for x in xs),) + trail

    itemsize = np.dtype(dtype).itemsize
    total_bytes = M * Ktot * itemsize

    # Small-input fast path: XLA's native concat beats the launch overhead.
    if total_bytes < min_pallas_bytes:
        return jnp.concatenate(xs, axis=d)

    # Lane-dense 2-D views (pure reshapes of contiguous arrays -> no HBM copy).
    xs2d = [x.reshape(M, k) for x, k in zip(xs, col_sizes)]

    # ----- tile selection ----------------------------------------------------
    sub = _sublane_multiple(dtype)
    vmem_limit = _scoped_vmem_limit_bytes()
    budget = max(vmem_limit - 4 * 1024 * 1024, 4 * 1024 * 1024)
    # double-buffered inputs (sum of widths = Ktot) + double-buffered output.
    bytes_per_row = 4 * Ktot * itemsize
    tm = max(sub, (budget // bytes_per_row) // sub * sub)
    # TODO(synk): for pathologically wide Ktot (one row > VMEM budget), switch
    # to a manual HBM->HBM strided-DMA variant (memory_space=pl.ANY) instead.

    if tm >= M:
        if M > sub:
            # Guarantee >= 2 grid steps so "parallel" shards rows across the
            # two TensorCores on v7x (free on v5e/v6e).
            half = -(-M // 2)                        # ceil(M / 2)
            tm = max(sub, -(-half // sub) * sub)     # round half up to sublane
            if tm >= M:                              # safety (degenerate M)
                tm = max(sub, (M // 2) // sub * sub)
                if tm == 0 or tm >= M:
                    tm = M
        else:
            tm = M                                   # full extent: always legal

    grid = (pl.cdiv(M, tm),)                         # partial last block is OK
    kernel = _make_concat_kernel(col_sizes)

    in_specs = [pl.BlockSpec((tm, k), lambda i: (i, 0)) for k in col_sizes]
    out_spec = pl.BlockSpec((tm, Ktot), lambda i: (i, 0))

    out2d = pl.pallas_call(
        kernel,
        out_shape=jax.ShapeDtypeStruct((M, Ktot), dtype),
        grid_spec=pltpu.PrefetchScalarGridSpec(
            num_scalar_prefetch=0,
            grid=grid,
            in_specs=in_specs,
            out_specs=out_spec,
        ),
        compiler_params=pltpu.CompilerParams(
            dimension_semantics=("parallel",),
            vmem_limit_bytes=vmem_limit,
        ),
    )(*xs2d)

    return out2d.reshape(out_full_shape)


# ----------------------------------------------------------------------------
if __name__ == "__main__":
    key = jax.random.PRNGKey(0)
    k1, k2, k3, k4 = jax.random.split(key, 4)

    # Case 1: small NCHW inputs, channel-dim concat (the module's typical use).
    N, C, H, W = 2, 4, 16, 16
    x1 = jax.random.normal(k1, (N, C, H, W), jnp.float32)
    x2 = jax.random.normal(k2, (N, 2 * C, H, W), jnp.float32)
    out = jax.block_until_ready(concat([x1, x2], dimension=1, min_pallas_bytes=0))
    ref = jax.block_until_ready(jnp.concatenate([x1, x2], axis=1))
    np.testing.assert_allclose(np.asarray(out), np.asarray(ref), rtol=0, atol=0)
    assert out.shape == (N, 3 * C, H, W)

    # Case 2: awkward leading extent (M = 33, not a multiple of 8) to exercise
    # the multi-step grid with a masked partial last block.
    N2 = 33
    y1 = jax.random.normal(k3, (N2, C, H, W), jnp.float32)
    y2 = jax.random.normal(k4, (N2, 2 * C, H, W), jnp.float32)
    out2 = jax.block_until_ready(concat([y1, y2], dimension=1, min_pallas_bytes=0))
    ref2 = jax.block_until_ready(jnp.concatenate([y1, y2], axis=1))
    np.testing.assert_allclose(np.asarray(out2), np.asarray(ref2), rtol=0, atol=0)
    assert out2.shape == (N2, 3 * C, H, W)

    print("KERNEL_OK")
</pallas_src>

<mosaic_0001>
module attributes {stable_mosaic.version = 11 : i64} {
  func.func @kernel(%arg0: i32, %arg1: memref<2x1024xf32, #tpu.memory_space<vmem>>, %arg2: memref<2x2048xf32, #tpu.memory_space<vmem>>, %arg3: memref<2x3072xf32, #tpu.memory_space<vmem>>) attributes {dimension_semantics = [#tpu.dimension_semantics<parallel>], iteration_bounds = array<i64: 1>, scalar_prefetch = 0 : i64, scratch_operands = 0 : i64, tpu.core_type = #tpu.core_type<tc>, window_params = [{transform_indices = @transform_0, window_bounds = array<i64: 2, 1024>}, {transform_indices = @transform_1, window_bounds = array<i64: 2, 2048>}, {transform_indices = @transform_2, window_bounds = array<i64: 2, 3072>}]} {
    %c0 = arith.constant 0 : index
    %c0_0 = arith.constant 0 : index
    %0 = vector.load %arg1[%c0, %c0_0] : memref<2x1024xf32, #tpu.memory_space<vmem>>, vector<2x1024xf32>
    %c0_1 = arith.constant 0 : index
    %c0_2 = arith.constant 0 : index
    %1 = vector.load %arg3[%c0_1, %c0_2] : memref<2x3072xf32, #tpu.memory_space<vmem>>, vector<2x1024xf32>
    tpu.vector_store %arg3[%c0_1, %c0_2], %0 {strides = array<i32>} : memref<2x3072xf32, #tpu.memory_space<vmem>>, vector<2x1024xf32>,
    %c0_3 = arith.constant 0 : index
    %c0_4 = arith.constant 0 : index
    %2 = vector.load %arg2[%c0_3, %c0_4] : memref<2x2048xf32, #tpu.memory_space<vmem>>, vector<2x2048xf32>
    %c0_5 = arith.constant 0 : index
    %c1024 = arith.constant 1024 : index
    %3 = vector.load %arg3[%c0_5, %c1024] : memref<2x3072xf32, #tpu.memory_space<vmem>>, vector<2x2048xf32>
    tpu.vector_store %arg3[%c0_5, %c1024], %2 {strides = array<i32>} : memref<2x3072xf32, #tpu.memory_space<vmem>>, vector<2x2048xf32>,
    return
  }
  func.func @transform_0(%arg0: i32) -> (i32, i32) {
    %c0_i32 = arith.constant 0 : i32
    %c0_i32_0 = arith.constant 0 : i32
    return %arg0, %c0_i32 : i32, i32
  }
  func.func @transform_1(%arg0: i32) -> (i32, i32) {
    %c0_i32 = arith.constant 0 : i32
    %c0_i32_0 = arith.constant 0 : i32
    return %arg0, %c0_i32 : i32, i32
  }
  func.func @transform_2(%arg0: i32) -> (i32, i32) {
    %c0_i32 = arith.constant 0 : i32
    %c0_i32_0 = arith.constant 0 : i32
    return %arg0, %c0_i32 : i32, i32
  }
}

</mosaic_0001>

<llo_original>
// kernel: tpu_custom_call.1
$region0: #{tpu_custom_call.1}
  #allocation0 [shape = 'u32[]', space=smem, size = 0x4, offset = 0x4, fixed_abs, tag = 'smem constant byte address 0x4 - core index']
  #allocation1 [shape = 'u32[72,128]{1,0:T(1,128)}', space=vmem, size = 0x9000, scoped, tag = 'internal scratch']
  %s0 = inlined_call_operand.hbm [shape: f32[2,1024], index: 0, kind: input, shape index: {}]
  %s1 = inlined_call_operand.hbm [shape: f32[2,2048], index: 1, kind: input, shape index: {}]
  %s2 = inlined_call_operand.hbm [shape: f32[2,3072], index: 2, kind: output, shape index: {}]
  %s3 = sld [smem:[#allocation0]]
  $region26: #{tpu_custom_call.1} parent=0
    _
  %s5 = ssub.s32 1, %s3
  %s6 = scalar_select 0, %s5, %s3
  $region1: #{tpu_custom_call.1} parent=0
    #allocation2 [shape = 'u8[8192]{0}', space=vmem, size = 0x2000, scoped, tag = 'input window, operand 0, single buffered']
    #allocation3 [shape = 's32[1]{0}', space=sflag, size = 0x4, scoped, tag = 'scoped memory for tpu_custom_call.1']
    #allocation4 [shape = 's32[1]{0}', space=sflag, size = 0x4, scoped, tag = 'scoped memory for tpu_custom_call.1']
    #allocation5 [shape = 'u8[16384]{0}', space=vmem, size = 0x4000, scoped, tag = 'input window, operand 1, single buffered']
    #allocation6 [shape = 's32[1]{0}', space=sflag, size = 0x4, scoped, tag = 'scoped memory for tpu_custom_call.1']
    #allocation7 [shape = 'u8[24576]{0}', space=vmem, size = 0x6000, scoped, tag = 'output window, operand 0, single buffered']
    %7 = vsyncpa [#allocation3], 0
    %8 = vsyncpa [#allocation6], 0
    %9 = vsyncpa [#allocation4], 0
    // Predicated region
    $region2: #{tpu_custom_call.1} parent=1 // pred_check
      _
    $region3: #{tpu_custom_call.1} parent=1 // pred_check_branch
      %11 = sbr.rel (0) target = $region5
    $region4: #{tpu_custom_call.1} parent=1 // pred_region
      %13 = vsyncadd [#allocation3], 0
      %s15 = sshll.u32 %s0, 4
      %s16 = int_to_ptr.hbm [resolvable:$true] %s15
      %s17 = sshll.u32 [#allocation2], 4
      %s18 = int_to_ptr.vmem [resolvable:$true] %s17
      %20 = dma.hbm_to_vmem [thread:$0]  %s16, 256, %s18, [#allocation3]
    $region5: #{tpu_custom_call.1} parent=1 // pred_fallthru
      _
    // Predicated region
    $region6: #{tpu_custom_call.1} parent=1 // pred_check
      _
    $region7: #{tpu_custom_call.1} parent=1 // pred_check_branch
      %22 = sbr.rel (0) target = $region9
    $region8: #{tpu_custom_call.1} parent=1 // pred_region
      %24 = vsyncadd [#allocation6], 0
      %s26 = sshll.u32 %s1, 4
      %s27 = int_to_ptr.hbm [resolvable:$true] %s26
      %s28 = sshll.u32 [#allocation5], 4
      %s29 = int_to_ptr.vmem [resolvable:$true] %s28
      %31 = dma.hbm_to_vmem [thread:$0]  %s27, 512, %s29, [#allocation6]
    $region9: #{tpu_custom_call.1} parent=1 // pred_fallthru
      _
    // Predicated region
    $region10: #{tpu_custom_call.1} parent=1 // pred_check
      _
    $region11: #{tpu_custom_call.1} parent=1 // pred_check_branch
      %33 = sbr.rel (0) target = $region13
    $region12: #{tpu_custom_call.1} parent=1 // pred_region
      %35 = dma.done [#allocation3], 256
    $region13: #{tpu_custom_call.1} parent=1 // pred_fallthru
      _
    // Predicated region
    $region14: #{tpu_custom_call.1} parent=1 // pred_check
      _
    $region15: #{tpu_custom_call.1} parent=1 // pred_check_branch
      %37 = sbr.rel (0) target = $region17
    $region16: #{tpu_custom_call.1} parent=1 // pred_region
      %39 = dma.done [#allocation6], 512
    $region17: #{tpu_custom_call.1} parent=1 // pred_fallthru
      _
    %v40 = vld [vmem:[#allocation2] sm:$0xff]
    %v41 = vld [vmem:[#allocation2 + $0x8] sm:$0xff]
    %42 = vst [vmem:[#allocation7] sm:$0xff] %v40
    %43 = vst [vmem:[#allocation7 + $0x8] sm:$0xff] %v41
    %v44 = vld [vmem:[#allocation5] sm:$0xff]
    %v45 = vld [vmem:[#allocation5 + $0x8] sm:$0xff]
    %v46 = vld [vmem:[#allocation5 + $0x10] sm:$0xff]
    %v47 = vld [vmem:[#allocation5 + $0x18] sm:$0xff]
    %48 = vst [vmem:[#allocation7 + $0x10] sm:$0xff] %v44
    %49 = vst [vmem:[#allocation7 + $0x18] sm:$0xff] %v45
    %50 = vst [vmem:[#allocation7 + $0x20] sm:$0xff] %v46
    %51 = vst [vmem:[#allocation7 + $0x28] sm:$0xff] %v47
    // Predicated region
    $region18: #{tpu_custom_call.1} parent=1 // pred_check
      _
    $region19: #{tpu_custom_call.1} parent=1 // pred_check_branch
      %53 = sbr.rel (0) target = $region21
    $region20: #{tpu_custom_call.1} parent=1 // pred_region
      %55 = vsyncadd [#allocation4], 0
      %s57 = sshll.u32 [#allocation7], 4
      %s58 = int_to_ptr.vmem [resolvable:$true] %s57
      %s59 = sshll.u32 %s2, 4
      %s60 = int_to_ptr.hbm [resolvable:$true] %s59
      %62 = dma.vmem_to_hbm [thread:$0]  %s58, 768, %s60, [#allocation4]
    $region21: #{tpu_custom_call.1} parent=1 // pred_fallthru
      _
    // Predicated region
    $region22: #{tpu_custom_call.1} parent=1 // pred_check
      _
    $region23: #{tpu_custom_call.1} parent=1 // pred_check_branch
      %64 = sbr.rel (0) target = $region25
    $region24: #{tpu_custom_call.1} parent=1 // pred_region
      %66 = dma.done [#allocation4], 768
    $region25: #{tpu_custom_call.1} parent=1 // pred_fallthru
      _
    %67 = vsyncpa [#allocation3], 1
    %68 = vsyncpa [#allocation6], 1
    %69 = vsyncpa [#allocation4], 1

</llo_original>
